<compile_context>
chip_gen: v6e
topology: v6e:2x2x1
jax: 0.10.0
libtpu: 0.0.40
codegen_flags: <defaults>
</compile_context>

<pallas_src>
import functools

import jax
import jax.numpy as jnp
from jax.experimental import pallas as pl
from jax.experimental.pallas import tpu as pltpu

_SUBLANE = 8  # sublane granularity for the second-to-last block dim


def _round_up(x: int, m: int) -> int:
    return ((x + m - 1) // m) * m


def _decoder_kernel(state_ref, w_ref, b_ref, out_ref, *, mxu_dtype):
    """out = sigmoid(state @ W + b): matmul on MXU, exp on EUP, f32 accumulate."""
    x = state_ref[...]
    w = w_ref[...]
    if mxu_dtype is not None:
        # In-kernel cast only: feeds the MXU in a narrower dtype without an
        # extra HBM pass in the wrapper.
        x = x.astype(mxu_dtype)
        w = w.astype(mxu_dtype)
    logits = jnp.dot(x, w, preferred_element_type=jnp.float32)
    logits = logits + b_ref[...].astype(jnp.float32)
    # Exact sigmoid; exp sits on the EUP slot which has plenty of slack here.
    sig = 1.0 / (1.0 + jnp.exp(-logits))
    out_ref[...] = sig.astype(out_ref.dtype)


def multimod_decoder(state: jax.Array, weight_t: jax.Array, bias: jax.Array,
                     *, tile_b: int | None = None,
                     mxu_dtype=None) -> jax.Array:
    """Pallas forward of the MultiModN (logistic) decoder.

    state:    (B, state_size)
    weight_t: (state_size, n_classes)   (transposed vs. torch nn.Linear.weight)
    bias:     (n_classes,)
    returns:  (B, n_classes) in state.dtype
    """
    B, S = state.shape
    S2, C = weight_t.shape
    assert S == S2, "state_size mismatch"
    out_dtype = state.dtype

    bias2d = bias.reshape(1, C)  # metadata-only reshape

    # --- batch tile selection: aim for several pipelined grid steps ---------
    if tile_b is None:
        if B <= 256:
            tile_b = _round_up(B, _SUBLANE)
        else:
            # ~8 grid steps with a 256-row floor: enough steps for DMA/compute
            # overlap on v5e/v6e and for both v7x TensorCores to get work.
            tile_b = max(256, _round_up(-(-B // 8), _SUBLANE))
    tile_b = max(_SUBLANE, _round_up(min(tile_b, _round_up(B, _SUBLANE)),
                                     _SUBLANE))

    # Keep the double-buffered working set small (well under the scoped-VMEM
    # default on every chip, including v7x).  Weight/bias are constant-index
    # blocks -> single-buffered, counted once.
    def _footprint(tb: int) -> int:
        return (2 * tb * S * state.dtype.itemsize
                + 2 * tb * C * jnp.dtype(out_dtype).itemsize
                + S * C * weight_t.dtype.itemsize
                + C * bias.dtype.itemsize)

    while tile_b > _SUBLANE and _footprint(tile_b) > (8 << 20):
        tile_b = _round_up(tile_b // 2, _SUBLANE)

    grid = (pl.cdiv(B, tile_b),)   # ragged last block handled by Pallas

    cost = pl.CostEstimate(
        flops=2 * B * S * C,
        transcendentals=B * C,  # one exp per output element
        bytes_accessed=(B * S * state.dtype.itemsize
                        + S * C * weight_t.dtype.itemsize
                        + C * bias.dtype.itemsize
                        + B * C * jnp.dtype(out_dtype).itemsize),
    )

    return pl.pallas_call(
        functools.partial(_decoder_kernel, mxu_dtype=mxu_dtype),
        out_shape=jax.ShapeDtypeStruct((B, C), out_dtype),
        grid_spec=pltpu.PrefetchScalarGridSpec(
            num_scalar_prefetch=0,
            grid=grid,
            in_specs=[
                pl.BlockSpec((tile_b, S), lambda i: (i, 0)),  # state tile
                pl.BlockSpec((S, C), lambda i: (0, 0)),       # full weight
                pl.BlockSpec((1, C), lambda i: (0, 0)),       # bias row
            ],
            out_specs=pl.BlockSpec((tile_b, C), lambda i: (i, 0)),
        ),
        compiler_params=pltpu.CompilerParams(
            dimension_semantics=("parallel",)),
        cost_estimate=cost,
    )(state, weight_t, bias2d)


def _reference(state, weight_t, bias):
    return jax.nn.sigmoid(state.astype(jnp.float32) @ weight_t.astype(jnp.float32)
                          + bias.astype(jnp.float32)[None, :])


if __name__ == "__main__":
    key = jax.random.PRNGKey(0)

    # Module-consistent small shapes.
    batch = 8
    state_size = 32     # MultiModN hidden state size
    n_classes = 8       # decoder output classes

    k_state, k_w, k_b = jax.random.split(key, 3)
    state = jax.random.normal(k_state, (batch, state_size), dtype=jnp.float32)

    # Deterministic "torch.nn.Linear"-style init: U(-1/sqrt(in), 1/sqrt(in)).
    # Prepared once (module constants), not per forward call.
    bound = 1.0 / (state_size ** 0.5)
    weight_t = jax.random.uniform(k_w, (state_size, n_classes),
                                  minval=-bound, maxval=bound,
                                  dtype=jnp.float32)
    bias = jax.random.uniform(k_b, (n_classes,),
                              minval=-bound, maxval=bound, dtype=jnp.float32)

    # --- small check: single-step grid, f32, exact sigmoid ------------------
    out = jax.block_until_ready(multimod_decoder(state, weight_t, bias))
    ref = _reference(state, weight_t, bias)
    assert out.shape == (batch, n_classes)
    assert jnp.allclose(out, ref, atol=1e-5, rtol=1e-5), "mismatch (f32 small)"

    # --- ragged multi-step grid check: B=1000, default tile (256 rows x 4) --
    big_batch = 1000    # not a multiple of the tile -> exercises ragged block
    state_big = jax.random.normal(jax.random.fold_in(k_state, 1),
                                  (big_batch, state_size), dtype=jnp.float32)
    out_big = jax.block_until_ready(multimod_decoder(state_big, weight_t, bias))
    ref_big = _reference(state_big, weight_t, bias)
    assert out_big.shape == (big_batch, n_classes)
    assert jnp.allclose(out_big, ref_big, atol=1e-5, rtol=1e-5), \
        "mismatch (f32 ragged grid)"

    # --- in-kernel bf16 MXU path (no extra HBM pass in the wrapper) ---------
    out_bf = jax.block_until_ready(
        multimod_decoder(state_big, weight_t, bias, mxu_dtype=jnp.bfloat16))
    assert out_bf.shape == (big_batch, n_classes)
    assert jnp.allclose(out_bf, ref_big, atol=2e-2), "mismatch (bf16 MXU)"

    print("KERNEL_OK")
</pallas_src>

<mosaic_0001>
module attributes {stable_mosaic.version = 11 : i64} {
  func.func @_decoder_kernel(%arg0: i32, %arg1: memref<8x32xf32, #tpu.memory_space<vmem>>, %arg2: memref<32x8xf32, #tpu.memory_space<vmem>>, %arg3: memref<1x8xf32, #tpu.memory_space<vmem>>, %arg4: memref<8x8xf32, #tpu.memory_space<vmem>>) attributes {dimension_semantics = [#tpu.dimension_semantics<parallel>], iteration_bounds = array<i64: 1>, scalar_prefetch = 0 : i64, scratch_operands = 0 : i64, tpu.core_type = #tpu.core_type<tc>, window_params = [{transform_indices = @transform_0, window_bounds = array<i64: 8, 32>}, {pipeline_mode = #tpu.pipeline_mode<synchronous>, transform_indices = @transform_1, window_bounds = array<i64: 32, 8>}, {pipeline_mode = #tpu.pipeline_mode<synchronous>, transform_indices = @transform_2, window_bounds = array<i64: 1, 8>}, {transform_indices = @transform_3, window_bounds = array<i64: 8, 8>}]} {
    %c0 = arith.constant 0 : index
    %c0_0 = arith.constant 0 : index
    %0 = vector.load %arg1[%c0, %c0_0] : memref<8x32xf32, #tpu.memory_space<vmem>>, vector<8x32xf32>
    %c0_1 = arith.constant 0 : index
    %c0_2 = arith.constant 0 : index
    %1 = vector.load %arg2[%c0_1, %c0_2] : memref<32x8xf32, #tpu.memory_space<vmem>>, vector<32x8xf32>
    %cst = arith.constant dense<0.000000e+00> : vector<8x8xf32>
    %2 = tpu.matmul %0, %1, %cst {dimension_numbers = #tpu.dot_dimension_numbers<[1], [0], [0], [1], [0, 0, 1, 1], [], []>} : vector<8x32xf32>, vector<32x8xf32>, vector<8x8xf32> -> vector<8x8xf32>
    %c0_3 = arith.constant 0 : index
    %c0_4 = arith.constant 0 : index
    %3 = vector.load %arg3[%c0_3, %c0_4] : memref<1x8xf32, #tpu.memory_space<vmem>>, vector<1x8xf32>
    %4 = vector.broadcast %3 : vector<1x8xf32> to vector<8x8xf32>
    %5 = arith.addf %2, %4 : vector<8x8xf32>
    %cst_5 = arith.constant 0.000000e+00 : f32
    %6 = vector.broadcast %cst_5 : f32 to vector<8x8xf32>
    %7 = arith.subf %6, %5 : vector<8x8xf32>
    %8 = math.exp %7 : vector<8x8xf32>
    %cst_6 = arith.constant 1.000000e+00 : f32
    %9 = vector.broadcast %cst_6 : f32 to vector<8x8xf32>
    %10 = arith.addf %9, %8 : vector<8x8xf32>
    %cst_7 = arith.constant 1.000000e+00 : f32
    %11 = vector.broadcast %cst_7 : f32 to vector<8x8xf32>
    %12 = arith.divf %11, %10 : vector<8x8xf32>
    %c0_8 = arith.constant 0 : index
    %c0_9 = arith.constant 0 : index
    %13 = vector.load %arg4[%c0_8, %c0_9] : memref<8x8xf32, #tpu.memory_space<vmem>>, vector<8x8xf32>
    tpu.vector_store %arg4[%c0_8, %c0_9], %12 {strides = array<i32>} : memref<8x8xf32, #tpu.memory_space<vmem>>, vector<8x8xf32>,
    return
  }
  func.func @transform_0(%arg0: i32) -> (i32, i32) {
    %c0_i32 = arith.constant 0 : i32
    %c0_i32_0 = arith.constant 0 : i32
    return %arg0, %c0_i32 : i32, i32
  }
  func.func @transform_1(%arg0: i32) -> (i32, i32) {
    %c0_i32 = arith.constant 0 : i32
    %c0_i32_0 = arith.constant 0 : i32
    %c0_i32_1 = arith.constant 0 : i32
    return %c0_i32, %c0_i32_0 : i32, i32
  }
  func.func @transform_2(%arg0: i32) -> (i32, i32) {
    %c0_i32 = arith.constant 0 : i32
    %c0_i32_0 = arith.constant 0 : i32
    %c0_i32_1 = arith.constant 0 : i32
    return %c0_i32, %c0_i32_0 : i32, i32
  }
  func.func @transform_3(%arg0: i32) -> (i32, i32) {
    %c0_i32 = arith.constant 0 : i32
    %c0_i32_0 = arith.constant 0 : i32
    return %arg0, %c0_i32 : i32, i32
  }
}

</mosaic_0001>

<llo_original>
// kernel: tpu_custom_call.1
$region0: #{tpu_custom_call.1}
  #allocation0 [shape = 'u32[]', space=smem, size = 0x4, offset = 0x4, fixed_abs, tag = 'smem constant byte address 0x4 - core index']
  #allocation1 [shape = 'u32[144,128]{1,0:T(1,128)}', space=vmem, size = 0x12000, scoped, tag = 'internal scratch']
  %s0 = inlined_call_operand.vmem [shape: f32[8,32], index: 0, kind: input, shape index: {}]
  %s1 = inlined_call_operand.vmem [shape: f32[32,8], index: 1, kind: input, shape index: {}]
  %s2 = inlined_call_operand.vmem [shape: f32[1,8], index: 2, kind: input, shape index: {}]
  %s3 = inlined_call_operand.hbm [shape: f32[8,8], index: 3, kind: output, shape index: {}]
  %s4 = sld [smem:[#allocation0]]
  $region22: #{tpu_custom_call.1} parent=0
    _
  %s6 = ssub.s32 1, %s4
  %s7 = scalar_select 0, %s6, %s4
  $region1: #{tpu_custom_call.1} parent=0
    #allocation2 [shape = 'u8[4096]{0}', space=vmem, size = 0x1000, scoped, tag = 'output window, operand 0, single buffered']
    #allocation3 [shape = 's32[1]{0}', space=sflag, size = 0x4, scoped, tag = 'scoped memory for tpu_custom_call.1']
    %8 = vsyncpa [#allocation3], 0
    // Predicated region
    $region2: #{tpu_custom_call.1} parent=1 // pred_check
      _
    $region3: #{tpu_custom_call.1} parent=1 // pred_check_branch
      %10 = sbr.rel (0) target = $region5
    $region4: #{tpu_custom_call.1} parent=1 // pred_region
      _
    $region5: #{tpu_custom_call.1} parent=1 // pred_fallthru
      _
    // Predicated region
    $region6: #{tpu_custom_call.1} parent=1 // pred_check
      _
    $region7: #{tpu_custom_call.1} parent=1 // pred_check_branch
      %12 = sbr.rel (0) target = $region9
    $region8: #{tpu_custom_call.1} parent=1 // pred_region
      _
    $region9: #{tpu_custom_call.1} parent=1 // pred_fallthru
      _
    // Predicated region
    $region10: #{tpu_custom_call.1} parent=1 // pred_check
      _
    $region11: #{tpu_custom_call.1} parent=1 // pred_check_branch
      %14 = sbr.rel (0) target = $region13
    $region12: #{tpu_custom_call.1} parent=1 // pred_region
      _
    $region13: #{tpu_custom_call.1} parent=1 // pred_fallthru
      _
    %v15 = vld [vmem:[%s0] sm:$0xff]
    %v16 = vld [vmem:[%s1] sm:$0xff]
    %v17 = vld [vmem:[%s1 + $0x8] sm:$0xff]
    %v18 = vld [vmem:[%s1 + $0x10] sm:$0xff]
    %v19 = vld [vmem:[%s1 + $0x18] sm:$0xff]
    %v20 = vld [vmem:[%s2] sm:$0x1]
    %v22 = vlaneseq
    %v23 = vshrl.u32 %v22, 7
    %v24 = vsub.s32 0, %v23
    %v25 = vrot.slane %v20, %v24
    %vm27 = vcmask 261120
    %v29 = vsel %vm27, %v15, 0
    %31 = vmatprep.subr.mxu0 0.0
    %32 = vmatpush1.msra.mxu0 0.0
    %33 = vmatprep.subr.mxu0 0.0
    %34 = vmatpush1.msra.mxu0 0.0
    %35 = vmatprep.subr.mxu0 0.0
    %36 = vmatpush1.msra.mxu0 0.0
    %37 = vmatprep.subr.mxu0 0.0
    %38 = vmatpush1.msra.mxu0 0.0
    %39 = vmatprep.subr.mxu0 0.0
    %40 = vmatpush1.msra.mxu0 0.0
    %41 = vmatprep.subr.mxu0 0.0
    %42 = vmatpush1.msra.mxu0 0.0
    %43 = vmatprep.subr.mxu0 0.0
    %44 = vmatpush1.msra.mxu0 0.0
    %45 = vmatprep.subr.mxu0 0.0
    %46 = vmatpush1.msra.mxu0 0.0
    %47 = vmatprep.subr.mxu0 0.0
    %48 = vmatpush1.msra.mxu0 0.0
    %49 = vmatprep.subr.mxu0 0.0
    %50 = vmatpush1.msra.mxu0 0.0
    %51 = vmatprep.subr.mxu0 0.0
    %52 = vmatpush1.msra.mxu0 0.0
    %53 = vmatprep.subr.mxu0 0.0
    %54 = vmatpush1.msra.mxu0 0.0
    %55 = vmatprep.subr.mxu0 0.0
    %56 = vmatpush1.msra.mxu0 %v19
    %57 = vmatprep.subr.mxu0 0.0
    %58 = vmatpush1.msra.mxu0 %v18
    %59 = vmatprep.subr.mxu0 0.0
    %60 = vmatpush1.msra.mxu0 %v17
    %61 = vmatprep.subr.mxu0 0.0
    %62 = vmatpush1.msra.mxu0 %v16
    %63 = vmatprep.subr.mxu0 0.0
    %64 = vmatpush2.msra.mxu0 0.0
    %65 = vmatprep.subr.mxu0 0.0
    %66 = vmatpush2.msra.mxu0 0.0
    %67 = vmatprep.subr.mxu0 0.0
    %68 = vmatpush2.msra.mxu0 0.0
    %69 = vmatprep.subr.mxu0 0.0
    %70 = vmatpush2.msra.mxu0 0.0
    %71 = vmatprep.subr.mxu0 0.0
    %72 = vmatpush2.msra.mxu0 0.0
    %73 = vmatprep.subr.mxu0 0.0
    %74 = vmatpush2.msra.mxu0 0.0
    %75 = vmatprep.subr.mxu0 0.0
    %76 = vmatpush2.msra.mxu0 0.0
    %77 = vmatprep.subr.mxu0 0.0
    %78 = vmatpush2.msra.mxu0 0.0
    %79 = vmatprep.subr.mxu0 0.0
    %80 = vmatpush2.msra.mxu0 0.0
    %81 = vmatprep.subr.mxu0 0.0
    %82 = vmatpush2.msra.mxu0 0.0
    %83 = vmatprep.subr.mxu0 0.0
    %84 = vmatpush2.msra.mxu0 0.0
    %85 = vmatprep.subr.mxu0 0.0
    %86 = vmatpush2.msra.mxu0 0.0
    %87 = vmatprep.subr.mxu0 0.0
    %88 = vmatpush2.msra.mxu0 0.0
    %89 = vmatprep.subr.mxu0 0.0
    %90 = vmatpush2.msra.mxu0 0.0
    %91 = vmatprep.subr.mxu0 0.0
    %92 = vmatpush2.msra.mxu0 0.0
    %93 = vmatprep.subr.mxu0 0.0
    %94 = vmatpush2.msra.mxu0 0.0
    %95 = vmatprep.mubr.f32.mxu0 0.0
    %96 = vmatmul.mubr.f32.gmra.mxu0 %v29
    %v97 = vpop.f32.mrf.mxu0
    %v98 = vadd.f32 %v25, %v97
    %v99 = vpop.f32.mrf.mxu0
    %100 = vdwg.mxu0
    %v101 = vsub.f32 0.0, %v98
    %v102 = vmul.f32 %v101, 1.442695
    %v103 = vpow.pop %v102
    %v104 = vadd.f32 %v103, 1.0
    %v105 = vrcp.pop %v104
    %v106 = vmul.f32 1.0, %v105
    %vm107 = vcmask 64512
    %108 = vst.msk [vmem:[#allocation2] sm:$0xff] %vm107, %v106
    // Predicated region
    $region14: #{tpu_custom_call.1} parent=1 // pred_check
      _
    $region15: #{tpu_custom_call.1} parent=1 // pred_check_branch
      %110 = sbr.rel (0) target = $region17
    $region16: #{tpu_custom_call.1} parent=1 // pred_region
      %s112 = ssub.s32 128, 128
      %113 = vsyncadd [#allocation3], %s112
      %s115 = sshll.u32 [#allocation2], 4
      %s116 = int_to_ptr.vmem [resolvable:$true] %s115
      %118 = dma.vmem_to_hbm [thread:$0]  %s116, 128, %s3, [#allocation3]
    $region17: #{tpu_custom_call.1} parent=1 // pred_fallthru
      _
    // Predicated region
    $region18: #{tpu_custom_call.1} parent=1 // pred_check
      _
    $region19: #{tpu_custom_call.1} parent=1 // pred_check_branch
      %120 = sbr.rel (0) target = $region21
    $region20: #{tpu_custom_call.1} parent=1 // pred_region
      %121 = dma.done [#allocation3], 128
    $region21: #{tpu_custom_call.1} parent=1 // pred_fallthru
      _
    %122 = vsyncpa [#allocation3], 1

</llo_original>
